<compile_context>
chip_gen: v7x
topology: tpu7x:2x2x1
jax: 0.10.0
libtpu: 0.0.40
codegen_flags: <defaults>
</compile_context>

<pallas_src>
import functools
import math

import jax
import jax.numpy as jnp
from jax.experimental import pallas as pl
from jax.experimental.pallas import tpu as pltpu

F32 = jnp.float32
BF16 = jnp.bfloat16
BN_EPS = 1e-5                       # torch.nn.BatchNorm1d default
_VMEM_FLOOR = 32 * 1024 * 1024      # never below the previous (known-good) limit
_VMEM_CEIL = 48 * 1024 * 1024       # safe on v7x (64 MiB physical VMEM)
_FUSED_BYTES = 2 * 1024 * 1024      # K*N*C*4 threshold for the fully fused pt layer


# ----------------------------------------------------------------------------
# Tiling helpers
# ----------------------------------------------------------------------------
def _round_up(x, m):
    return ((x + m - 1) // m) * m


def _tiles(n, cap):
    """Row tiling: (tile_rows, padded_rows, grid). cap must be a multiple of 8."""
    if n < 8:
        return n, n, 1
    tm = min(_round_up(n, 8), cap)
    n_pad = _round_up(n, tm)
    return tm, n_pad, n_pad // tm


def _col_tiles(n, cap=256):
    if n <= cap:
        return n, n, 1
    n_pad = _round_up(n, cap)
    return cap, n_pad, n_pad // cap


def _pad_axis(x, axis, size):
    if x.shape[axis] == size:
        return x
    pads = [(0, 0)] * x.ndim
    pads[axis] = (0, size - x.shape[axis])
    return jnp.pad(x, pads)


def _vmem_params(n_parallel, block_bytes=0):
    # per-call scoped-VMEM budget: ~2.5x double-buffered block bytes + headroom,
    # clamped to [32 MiB, 48 MiB] (48 MiB is safe on all of v5e/v6e/v7x).
    limit = int(min(max(2.5 * block_bytes + (8 << 20), _VMEM_FLOOR), _VMEM_CEIL))
    return pltpu.CompilerParams(
        dimension_semantics=("parallel",) * n_parallel,
        vmem_limit_bytes=limit)


# ----------------------------------------------------------------------------
# Pallas kernels
# ----------------------------------------------------------------------------
def _linear_kernel(x_ref, w_ref, b_ref, o_ref, *, relu):
    y = jnp.dot(x_ref[...].astype(BF16), w_ref[...],
                preferred_element_type=jnp.float32) + b_ref[...]
    if relu:
        y = jnp.maximum(y, 0.0)
    o_ref[...] = y


def _linear3_kernel(x_ref, w_ref, b_ref, o_ref, *, relu):
    # cin == 3: keep the contraction on the VPU (a 3-deep MXU pass is <2% utilized).
    x = x_ref[...]
    w = w_ref[...]
    y = (x[:, 0:1] * w[0:1, :] + x[:, 1:2] * w[1:2, :] + x[:, 2:3] * w[2:3, :]
         + b_ref[...])
    if relu:
        y = jnp.maximum(y, 0.0)
    o_ref[...] = y


def _linear_stats_kernel(x_ref, w_ref, b_ref, o_ref, st_ref, *, n_rows, tm):
    """Linear + per-tile masked BN partial sums (sum, sum of squares)."""
    y = jnp.dot(x_ref[...].astype(BF16), w_ref[...],
                preferred_element_type=jnp.float32) + b_ref[...]
    o_ref[...] = y
    i = pl.program_id(0)
    rows = jax.lax.broadcasted_iota(jnp.int32, (tm, 1), 0)
    mask = (rows < (n_rows - i * tm)).astype(F32)
    s = jnp.sum(y * mask, axis=0, keepdims=True)
    ss = jnp.sum(y * y * mask, axis=0, keepdims=True)
    st_ref[...] = jnp.concatenate([s, ss], axis=0)[None]


def _affine_relu_kernel(h_ref, s_ref, t_ref, o_ref):
    # BatchNorm apply (scale/shift precomputed from batch stats) + ReLU.
    o_ref[...] = jnp.maximum(h_ref[...] * s_ref[...] + t_ref[...], 0.0)


def _lin3way_kernel(x_ref, wd_ref, ws_ref, wl_ref, od_ref, os_ref, ol_ref):
    # Fused lin_dst / lin_src / lin of the PointTransformerConv: x is DMA'd once.
    # All outputs bf16 (store-slot friendly; downstream consumers tolerate bf16).
    xb = x_ref[...].astype(BF16)
    od_ref[...] = jnp.dot(xb, wd_ref[...],
                          preferred_element_type=jnp.float32).astype(BF16)
    os_ref[...] = jnp.dot(xb, ws_ref[...],
                          preferred_element_type=jnp.float32).astype(BF16)
    ol_ref[...] = jnp.dot(xb, wl_ref[...],
                          preferred_element_type=jnp.float32).astype(BF16)


def _sqdist_kernel(a_ref, bt_ref, o_ref):
    # ||a_i - b_j||^2 computed on the VPU (contraction dim is only 3); clamp >= 0.
    a = a_ref[...]                       # (TM, 3)
    bt = bt_ref[...]                     # (3, TN)
    aa = a[:, 0:1] * a[:, 0:1] + a[:, 1:2] * a[:, 1:2] + a[:, 2:3] * a[:, 2:3]
    bb = (bt[0:1, :] * bt[0:1, :] + bt[1:2, :] * bt[1:2, :]
          + bt[2:3, :] * bt[2:3, :])
    ab = a[:, 0:1] * bt[0:1, :] + a[:, 1:2] * bt[1:2, :] + a[:, 2:3] * bt[2:3, :]
    o_ref[...] = jnp.maximum(aa + bb - 2.0 * ab, 0.0)


def _neighbor_max_kernel(xg_ref, o_ref):
    o_ref[...] = jnp.max(xg_ref[...], axis=0)


def _knn_interp_kernel(xg_ref, wn_ref, o_ref):
    # x_int[i] = sum_k wn_ik * x[nbr_ik]  (weights pre-normalized in XLA).
    k = xg_ref.shape[0]
    wn = wn_ref[...]                                     # (TM, K), lane-packed
    acc = xg_ref[0] * wn[:, 0:1]
    for m in range(1, k):
        acc = acc + xg_ref[m] * wn[:, m:m + 1]
    o_ref[...] = acc


def _pos_delta3(dpos, wp, bp):
    # pos_nn: (K, TM, 3) x (3, C) done as three VPU broadcast-FMAs (not MXU).
    out = bp[None]                                       # (1, 1, C)
    for d in range(3):
        out = out + dpos[:, :, d:d + 1] * wp[d:d + 1, :][None]
    return out                                           # (K, TM, C)


def _attn_hidden(alpha, w1_ref, b1_ref, k, tm, c):
    if tm % 8 == 0:
        # collapse the K neighbor matmuls into one (K*TM, C) x (C, C) MXU matmul
        return (jnp.dot(alpha.reshape(k * tm, c).astype(BF16), w1_ref[...],
                        preferred_element_type=jnp.float32)
                + b1_ref[...]).reshape(k, tm, c)
    return jnp.stack(                                    # tiny coarse levels (N < 8)
        [jnp.dot(alpha[m].astype(BF16), w1_ref[...],
                 preferred_element_type=jnp.float32) + b1_ref[...]
         for m in range(k)], axis=0)


def _pt_phase_a_kernel(adst_ref, asrcg_ref, hg_ref, dpos_ref, wp_ref, bp_ref,
                       w1_ref, b1_ref, h1_ref, val_ref, st_ref, *, n_rows, tm):
    """Phase A: per-edge alpha, attn-MLP hidden layer (bf16 out), fused BN partial
    sums, and val = lin(x_j) + pos_nn(delta) (bf16 out, so B never sees dpos)."""
    k, _, c = asrcg_ref.shape
    delta = _pos_delta3(dpos_ref[...], wp_ref[...], bp_ref[...])          # (K,TM,C)
    alpha = adst_ref[...].astype(F32)[None] - asrcg_ref[...].astype(F32) + delta
    h1 = _attn_hidden(alpha, w1_ref, b1_ref, k, tm, c)
    # masked per-tile partial sums for the training-mode edge BatchNorm
    i = pl.program_id(0)
    rows = jax.lax.broadcasted_iota(jnp.int32, (1, tm, 1), 1)
    mask = (rows < (n_rows - i * tm)).astype(F32)
    s = jnp.sum(jnp.sum(h1 * mask, axis=0), axis=0, keepdims=True)        # (1, C)
    ss = jnp.sum(jnp.sum(h1 * h1 * mask, axis=0), axis=0, keepdims=True)
    st_ref[...] = jnp.concatenate([s, ss], axis=0)[None]
    h1_ref[...] = h1.astype(BF16)
    val_ref[...] = (hg_ref[...].astype(F32) + delta).astype(BF16)


def _pt_softmax_agg(att, val, k):
    mx = jnp.max(att, axis=0)
    e = jnp.exp(att - mx[None])
    den = jnp.sum(e, axis=0)
    num = jnp.sum(e * val, axis=0)
    return num * pl.reciprocal(den, approx=True)


def _pt_phase_b_kernel(x_ref, h1_ref, val_ref, s_ref, t_ref, w2_ref, b2_ref,
                       wu_ref, bu_ref, o_ref, *, tm):
    """Phase B: BN-apply + ReLU + attn2 matmul, channel-wise softmax over the K
    incoming edges, aggregation, linear_up, residual add."""
    k, _, c = h1_ref.shape
    hr = jnp.maximum(h1_ref[...].astype(F32) * s_ref[...][None]
                     + t_ref[...][None], 0.0)
    att = _attn_hidden(hr, w2_ref, b2_ref, k, tm, c)
    conv = _pt_softmax_agg(att, val_ref[...].astype(F32), k)
    up = jnp.dot(conv.astype(BF16), wu_ref[...],
                 preferred_element_type=jnp.float32) + bu_ref[...]
    o_ref[...] = up + x_ref[...]                        # residual: data.x = out + data.x


def _pt_fused_kernel(x_ref, adst_ref, asrcg_ref, hg_ref, dpos_ref, wp_ref, bp_ref,
                     w1_ref, b1_ref, g_ref, bt_ref, w2_ref, b2_ref,
                     wu_ref, bu_ref, o_ref, *, n_rows):
    """Fully fused PointTransformerConv (single-tile levels): phase A + in-kernel
    edge BatchNorm statistics + phase B in one pallas_call (h1 never hits HBM)."""
    k, tm, c = asrcg_ref.shape
    delta = _pos_delta3(dpos_ref[...], wp_ref[...], bp_ref[...])          # (K,TM,C)
    alpha = adst_ref[...].astype(F32)[None] - asrcg_ref[...].astype(F32) + delta
    h1 = _attn_hidden(alpha, w1_ref, b1_ref, k, tm, c)
    # training-mode BatchNorm over the n_rows*K valid edges (padded rows masked)
    rows = jax.lax.broadcasted_iota(jnp.int32, (1, tm, 1), 1)
    mask = (rows < n_rows).astype(F32)
    cnt = float(n_rows * k)
    mu = jnp.sum(h1 * mask, axis=(0, 1), keepdims=True) / cnt             # (1,1,C)
    var = jnp.maximum(jnp.sum(h1 * h1 * mask, axis=(0, 1), keepdims=True) / cnt
                      - mu * mu, 0.0)
    inv = jax.lax.rsqrt(var + BN_EPS)
    scale = g_ref[...][None] * inv
    shift = bt_ref[...][None] - mu * scale
    hr = jnp.maximum(h1 * scale + shift, 0.0)
    att = _attn_hidden(hr, w2_ref, b2_ref, k, tm, c)
    val = hg_ref[...].astype(F32) + delta
    conv = _pt_softmax_agg(att, val, k)
    up = jnp.dot(conv.astype(BF16), wu_ref[...],
                 preferred_element_type=jnp.float32) + bu_ref[...]
    o_ref[...] = up + x_ref[...]


# ----------------------------------------------------------------------------
# pallas_call builders (cached per static shape)
# ----------------------------------------------------------------------------
@functools.lru_cache(maxsize=None)
def _build_linear(n_pad, tm, cin, cout, relu, use_vpu):
    kernel = functools.partial(_linear3_kernel if use_vpu else _linear_kernel,
                               relu=relu)
    blk = tm * cin * 4 + tm * cout * 4 + cin * cout * 4
    return pl.pallas_call(
        kernel,
        out_shape=jax.ShapeDtypeStruct((n_pad, cout), F32),
        grid=(n_pad // tm,),
        in_specs=[pl.BlockSpec((tm, cin), lambda i: (i, 0)),
                  pl.BlockSpec((cin, cout), lambda i: (0, 0)),
                  pl.BlockSpec((1, cout), lambda i: (0, 0))],
        out_specs=pl.BlockSpec((tm, cout), lambda i: (i, 0)),
        compiler_params=_vmem_params(1, blk))


@functools.lru_cache(maxsize=None)
def _build_linear_stats(n, n_pad, tm, cin, cout):
    grid = n_pad // tm
    kernel = functools.partial(_linear_stats_kernel, n_rows=n, tm=tm)
    blk = tm * cin * 4 + tm * cout * 4 + cin * cout * 2
    return pl.pallas_call(
        kernel,
        out_shape=(jax.ShapeDtypeStruct((n_pad, cout), F32),
                   jax.ShapeDtypeStruct((grid, 2, cout), F32)),
        grid=(grid,),
        in_specs=[pl.BlockSpec((tm, cin), lambda i: (i, 0)),
                  pl.BlockSpec((cin, cout), lambda i: (0, 0)),
                  pl.BlockSpec((1, cout), lambda i: (0, 0))],
        out_specs=(pl.BlockSpec((tm, cout), lambda i: (i, 0)),
                   pl.BlockSpec((1, 2, cout), lambda i: (i, 0, 0))),
        compiler_params=_vmem_params(1, blk))


@functools.lru_cache(maxsize=None)
def _build_affine_relu(n_pad, tm, c):
    return pl.pallas_call(
        _affine_relu_kernel,
        out_shape=jax.ShapeDtypeStruct((n_pad, c), F32),
        grid=(n_pad // tm,),
        in_specs=[pl.BlockSpec((tm, c), lambda i: (i, 0)),
                  pl.BlockSpec((1, c), lambda i: (0, 0)),
                  pl.BlockSpec((1, c), lambda i: (0, 0))],
        out_specs=pl.BlockSpec((tm, c), lambda i: (i, 0)),
        compiler_params=_vmem_params(1, 2 * tm * c * 4))


@functools.lru_cache(maxsize=None)
def _build_sqdist(na_pad, tm, nb_pad, tn):
    return pl.pallas_call(
        _sqdist_kernel,
        out_shape=jax.ShapeDtypeStruct((na_pad, nb_pad), F32),
        grid=(na_pad // tm, nb_pad // tn),
        in_specs=[pl.BlockSpec((tm, 3), lambda i, j: (i, 0)),
                  pl.BlockSpec((3, tn), lambda i, j: (0, j))],
        out_specs=pl.BlockSpec((tm, tn), lambda i, j: (i, j)),
        compiler_params=_vmem_params(2, tm * 128 * 4 + tm * tn * 4))


@functools.lru_cache(maxsize=None)
def _build_neighbor_max(n_pad, tm, k, c):
    return pl.pallas_call(
        _neighbor_max_kernel,
        out_shape=jax.ShapeDtypeStruct((n_pad, c), F32),
        grid=(n_pad // tm,),
        in_specs=[pl.BlockSpec((k, tm, c), lambda i: (0, i, 0))],
        out_specs=pl.BlockSpec((tm, c), lambda i: (i, 0)),
        compiler_params=_vmem_params(1, (k + 1) * tm * c * 4))


@functools.lru_cache(maxsize=None)
def _build_knn_interp(n_pad, tm, k, c):
    return pl.pallas_call(
        _knn_interp_kernel,
        out_shape=jax.ShapeDtypeStruct((n_pad, c), F32),
        grid=(n_pad // tm,),
        in_specs=[pl.BlockSpec((k, tm, c), lambda i: (0, i, 0)),
                  pl.BlockSpec((tm, k), lambda i: (i, 0))],
        out_specs=pl.BlockSpec((tm, c), lambda i: (i, 0)),
        compiler_params=_vmem_params(1, (k + 1) * tm * c * 4 + tm * 128 * 4))


@functools.lru_cache(maxsize=None)
def _build_lin3way(n_pad, tm, c):
    blk = tm * c * 4 + 3 * c * c * 2 + 3 * tm * c * 2
    return pl.pallas_call(
        _lin3way_kernel,
        out_shape=(jax.ShapeDtypeStruct((n_pad, c), BF16),
                   jax.ShapeDtypeStruct((n_pad, c), BF16),
                   jax.ShapeDtypeStruct((n_pad, c), BF16)),
        grid=(n_pad // tm,),
        in_specs=[pl.BlockSpec((tm, c), lambda i: (i, 0)),
                  pl.BlockSpec((c, c), lambda i: (0, 0)),
                  pl.BlockSpec((c, c), lambda i: (0, 0)),
                  pl.BlockSpec((c, c), lambda i: (0, 0))],
        out_specs=(pl.BlockSpec((tm, c), lambda i: (i, 0)),
                   pl.BlockSpec((tm, c), lambda i: (i, 0)),
                   pl.BlockSpec((tm, c), lambda i: (i, 0))),
        compiler_params=_vmem_params(1, blk))


@functools.lru_cache(maxsize=None)
def _build_pt_phase_a(n, n_pad, tm, k, c):
    grid = n_pad // tm
    kernel = functools.partial(_pt_phase_a_kernel, n_rows=n, tm=tm)
    blk = (tm * c * 2 + 4 * k * tm * c * 2 + k * tm * 128 * 4 + 2 * c * c * 2)
    return pl.pallas_call(
        kernel,
        out_shape=(jax.ShapeDtypeStruct((k, n_pad, c), BF16),       # h1
                   jax.ShapeDtypeStruct((k, n_pad, c), BF16),       # val
                   jax.ShapeDtypeStruct((grid, 2, c), F32)),        # BN partial sums
        grid=(grid,),
        in_specs=[pl.BlockSpec((tm, c), lambda i: (i, 0)),          # a_dst (bf16)
                  pl.BlockSpec((k, tm, c), lambda i: (0, i, 0)),    # a_src gathered
                  pl.BlockSpec((k, tm, c), lambda i: (0, i, 0)),    # lin(x_j) gathered
                  pl.BlockSpec((k, tm, 3), lambda i: (0, i, 0)),    # dpos
                  pl.BlockSpec((3, c), lambda i: (0, 0)),           # wp (pos_nn)
                  pl.BlockSpec((1, c), lambda i: (0, 0)),           # bp
                  pl.BlockSpec((c, c), lambda i: (0, 0)),           # w1 (bf16)
                  pl.BlockSpec((1, c), lambda i: (0, 0))],          # b1
        out_specs=(pl.BlockSpec((k, tm, c), lambda i: (0, i, 0)),
                   pl.BlockSpec((k, tm, c), lambda i: (0, i, 0)),
                   pl.BlockSpec((1, 2, c), lambda i: (i, 0, 0))),
        compiler_params=_vmem_params(1, blk))


@functools.lru_cache(maxsize=None)
def _build_pt_phase_b(n_pad, tm, k, c):
    kernel = functools.partial(_pt_phase_b_kernel, tm=tm)
    blk = (2 * tm * c * 4 + 2 * k * tm * c * 2 + 2 * c * c * 2)
    return pl.pallas_call(
        kernel,
        out_shape=jax.ShapeDtypeStruct((n_pad, c), F32),
        grid=(n_pad // tm,),
        in_specs=[pl.BlockSpec((tm, c), lambda i: (i, 0)),          # x (residual)
                  pl.BlockSpec((k, tm, c), lambda i: (0, i, 0)),    # h1 (bf16)
                  pl.BlockSpec((k, tm, c), lambda i: (0, i, 0)),    # val (bf16)
                  pl.BlockSpec((1, c), lambda i: (0, 0)),           # BN scale
                  pl.BlockSpec((1, c), lambda i: (0, 0)),           # BN shift
                  pl.BlockSpec((c, c), lambda i: (0, 0)),           # w2 (bf16)
                  pl.BlockSpec((1, c), lambda i: (0, 0)),           # b2
                  pl.BlockSpec((c, c), lambda i: (0, 0)),           # wu (bf16)
                  pl.BlockSpec((1, c), lambda i: (0, 0))],          # bu
        out_specs=pl.BlockSpec((tm, c), lambda i: (i, 0)),
        compiler_params=_vmem_params(1, blk))


@functools.lru_cache(maxsize=None)
def _build_pt_fused(n, n_pad, k, c):
    kernel = functools.partial(_pt_fused_kernel, n_rows=n)
    blk = (2 * n_pad * c * 4 + 2 * k * n_pad * c * 2 + k * n_pad * 128 * 4
           + 3 * c * c * 2 + 4 * k * n_pad * c * 4)     # includes f32 intermediates
    return pl.pallas_call(
        kernel,
        out_shape=jax.ShapeDtypeStruct((n_pad, c), F32),
        grid=(1,),
        in_specs=[pl.BlockSpec((n_pad, c), lambda i: (0, 0)),        # x (residual)
                  pl.BlockSpec((n_pad, c), lambda i: (0, 0)),        # a_dst (bf16)
                  pl.BlockSpec((k, n_pad, c), lambda i: (0, 0, 0)),  # a_src gathered
                  pl.BlockSpec((k, n_pad, c), lambda i: (0, 0, 0)),  # lin(x_j) gathered
                  pl.BlockSpec((k, n_pad, 3), lambda i: (0, 0, 0)),  # dpos
                  pl.BlockSpec((3, c), lambda i: (0, 0)),            # wp
                  pl.BlockSpec((1, c), lambda i: (0, 0)),            # bp
                  pl.BlockSpec((c, c), lambda i: (0, 0)),            # w1 (bf16)
                  pl.BlockSpec((1, c), lambda i: (0, 0)),            # b1
                  pl.BlockSpec((1, c), lambda i: (0, 0)),            # BN gamma
                  pl.BlockSpec((1, c), lambda i: (0, 0)),            # BN beta
                  pl.BlockSpec((c, c), lambda i: (0, 0)),            # w2 (bf16)
                  pl.BlockSpec((1, c), lambda i: (0, 0)),            # b2
                  pl.BlockSpec((c, c), lambda i: (0, 0)),            # wu (bf16)
                  pl.BlockSpec((1, c), lambda i: (0, 0))],           # bu
        out_specs=pl.BlockSpec((n_pad, c), lambda i: (0, 0)),
        compiler_params=_vmem_params(1, blk))


# ----------------------------------------------------------------------------
# Kernel wrappers
# ----------------------------------------------------------------------------
def linear(x, w, b=None, relu=False, row_cap=512):
    n, cin = x.shape
    cout = w.shape[1]
    if b is None:
        b = jnp.zeros((cout,), F32)
    x = x.astype(F32)
    use_vpu = (cin == 3)
    w = w.astype(F32) if use_vpu else w.astype(BF16)
    tm, n_pad, _ = _tiles(n, row_cap)
    out = _build_linear(n_pad, tm, cin, cout, relu, use_vpu)(
        _pad_axis(x, 0, n_pad), w, b.reshape(1, cout).astype(F32))
    return out[:n] if n_pad != n else out


def linear_bn_relu(x, p):
    """Linear -> BatchNorm1d (training-mode batch stats, biased var) -> ReLU.
    The BN partial sums are fused into the linear kernel (no full-tensor stats pass)."""
    n, cin = x.shape
    cout = p["w"].shape[1]
    cpad = _round_up(cout, 128)            # lane-dense stores (head widths 50 / 13)
    w = _pad_axis(p["w"].astype(BF16), 1, cpad)
    b = _pad_axis(p["b"].astype(F32), 0, cpad).reshape(1, cpad)
    gamma = _pad_axis(p["gamma"].astype(F32), 0, cpad)
    beta = _pad_axis(p["beta"].astype(F32), 0, cpad)
    tm, n_pad, _ = _tiles(n, 512)
    h, stats = _build_linear_stats(n, n_pad, tm, cin, cpad)(
        _pad_axis(x.astype(F32), 0, n_pad), w, b)
    tot = jnp.sum(stats, axis=0)                       # (2, cpad) tiny XLA reduce
    mu = tot[0] / n
    var = jnp.maximum(tot[1] / n - mu * mu, 0.0)
    inv = jax.lax.rsqrt(var + BN_EPS)
    scale = (gamma * inv).reshape(1, cpad)
    shift = (beta - mu * gamma * inv).reshape(1, cpad)
    y = _build_affine_relu(n_pad, tm, cpad)(h, scale, shift)
    y = y[:n] if n_pad != n else y
    return y[:, :cout] if cpad != cout else y


def pairwise_sqdist(a, b):
    na, nb = a.shape[0], b.shape[0]
    tm, na_pad, _ = _tiles(na, 256)
    tn, nb_pad, _ = _col_tiles(nb, 256)
    ap = _pad_axis(a.astype(F32), 0, na_pad)
    bt = _pad_axis(b.astype(F32).T, 1, nb_pad)
    d = _build_sqdist(na_pad, tm, nb_pad, tn)(ap, bt)
    return d[:na, :nb] if (na_pad != na or nb_pad != nb) else d


def neighbor_max(x, nbr):
    """tgnn.max_pool_neighbor_x: max over each node's neighbors + itself."""
    n, c = x.shape
    k = nbr.shape[1]
    xg = jnp.take(x.astype(F32), nbr.T, axis=0)                       # (K, N, C)
    tm, n_pad, _ = _tiles(n, 256)
    out = _build_neighbor_max(n_pad, tm, k, c)(_pad_axis(xg, 1, n_pad))
    return out[:n] if n_pad != n else out


def knn_interpolate(x_src, pos_src, pos_dst, k):
    """tg.nn.unpool.knn_interpolate with 1/d^2 weights (pre-normalized in XLA)."""
    k = min(k, x_src.shape[0])
    nd, c = pos_dst.shape[0], x_src.shape[1]
    d = pairwise_sqdist(pos_dst, pos_src)
    neg_d, nbr = jax.lax.top_k(-d, k)
    w = 1.0 / jnp.maximum(-neg_d, 1e-16)                              # (Nd, K)
    wn = w / jnp.sum(w, axis=1, keepdims=True)
    xg = jnp.take(x_src.astype(F32), nbr.T, axis=0)                   # (K, Nd, C)
    tm, n_pad, _ = _tiles(nd, 256)
    out = _build_knn_interp(n_pad, tm, k, c)(
        _pad_axis(xg, 1, n_pad), _pad_axis(wn.astype(F32), 0, n_pad))
    return out[:nd] if n_pad != nd else out


# ----------------------------------------------------------------------------
# Graph-construction glue (plain JAX)
# ----------------------------------------------------------------------------
def knn_graph_neighbors(pos, k):
    """KNNGraph(k, loop=False) + self-loop column (added by PointTransformerConv).
    Self-exclusion via top_k(k+1) + dropping the self column (no N x N eye pass)."""
    n = pos.shape[0]
    kk = min(k, n - 1)
    d = pairwise_sqdist(pos, pos)
    _, idx = jax.lax.top_k(-d, kk + 1)
    self_mask = (idx == jnp.arange(n, dtype=idx.dtype)[:, None]).astype(jnp.int32)
    order = jnp.argsort(self_mask, axis=1)            # stable: self pushed to the end
    nbr = jnp.take_along_axis(idx, order, axis=1)[:, :kk]
    self_idx = jnp.arange(n, dtype=jnp.int32)[:, None]
    return jnp.concatenate([nbr.astype(jnp.int32), self_idx], axis=1)


def fps_indices(pos, ratio):
    """Farthest point sampling, fully on-device; O(n_out * N) memory (no N^2 matrix).
    TODO(synk): torch_geometric fps uses a random start point; we start at index 0."""
    n = pos.shape[0]
    n_out = int(math.ceil(ratio * n))
    pos = pos.astype(F32)

    def body(i, carry):
        mind, sel = carry
        nxt = jnp.argmax(mind).astype(jnp.int32)
        sel = sel.at[i].set(nxt)
        dist = jnp.sum((pos - pos[nxt]) ** 2, axis=1)     # 3-wide VPU distance
        return jnp.minimum(mind, dist), sel

    sel0 = jnp.zeros((n_out,), jnp.int32)                 # index 0 is the start point
    mind0 = jnp.sum((pos - pos[0]) ** 2, axis=1)
    _, sel = jax.lax.fori_loop(1, n_out, body, (mind0, sel0))
    return jnp.sort(sel)


# ----------------------------------------------------------------------------
# Model layers
# ----------------------------------------------------------------------------
def point_trans_layer(p, x, pos, nbr):
    """PointTrans_Layer: PointTransformerConv + linear_up + residual."""
    n, c = x.shape
    k = nbr.shape[1]
    x = x.astype(F32)
    cap = 512 if c <= 256 else 256
    tm, n_pad, grid = _tiles(n, cap)

    # fused lin_dst / lin_src / lin (single kernel launch, x read once, bf16 outs)
    a_dst, a_src, h = _build_lin3way(n_pad, tm, c)(
        _pad_axis(x, 0, n_pad),
        p["lin_dst"]["w"].astype(BF16),
        p["lin_src"]["w"].astype(BF16),
        p["lin"]["w"].astype(BF16))

    # neighbor gathers directly into (K, N, C) layout (no extra transpose pass).
    # TODO(synk): gather at DMA time with a scalar-prefetched nbr table instead.
    nbrT = nbr.T                                                      # (K, N)
    asrc_g = jnp.take(a_src, nbrT, axis=0)                            # (K, N, C) bf16
    h_g = jnp.take(h, nbrT, axis=0)                                   # (K, N, C) bf16
    dpos = (pos[None, :, :].astype(F32)
            - jnp.take(pos.astype(F32), nbrT, axis=0))                # (K, N, 3)

    x_p = _pad_axis(x, 0, n_pad)
    asrc_p = _pad_axis(asrc_g, 1, n_pad)
    hg_p = _pad_axis(h_g, 1, n_pad)
    dpos_p = _pad_axis(dpos, 1, n_pad)

    wp = p["pos"]["w"].astype(F32)
    bp = p["pos"]["b"].reshape(1, c).astype(F32)
    w1 = p["attn1"]["w"].astype(BF16)
    b1 = p["attn1"]["b"].reshape(1, c).astype(F32)
    w2 = p["attn2"]["w"].astype(BF16)
    b2 = p["attn2"]["b"].reshape(1, c).astype(F32)
    wu = p["lin_up"]["w"].astype(BF16)
    bu = p["lin_up"]["b"].reshape(1, c).astype(F32)
    gamma = p["attn_bn"]["gamma"].astype(F32)
    beta = p["attn_bn"]["beta"].astype(F32)

    if grid == 1 and k * n_pad * c * 4 <= _FUSED_BYTES:
        # fully fused single-call path (coarse levels / small clouds are
        # launch-latency bound; h1 never leaves VMEM)
        out = _build_pt_fused(n, n_pad, k, c)(
            x_p, a_dst, asrc_p, hg_p, dpos_p, wp, bp, w1, b1,
            gamma.reshape(1, c), beta.reshape(1, c), w2, b2, wu, bu)
    else:
        # phase A: per-edge alpha + attn hidden layer + BN partial sums + val
        h1, val, stats = _build_pt_phase_a(n, n_pad, tm, k, c)(
            a_dst, asrc_p, hg_p, dpos_p, wp, bp, w1, b1)
        # attn-MLP BatchNorm1d: tiny (grid, 2, C) reduce in XLA
        tot = jnp.sum(stats, axis=0)
        cnt = float(n * k)
        mu = tot[0] / cnt
        var = jnp.maximum(tot[1] / cnt - mu * mu, 0.0)
        inv = jax.lax.rsqrt(var + BN_EPS)
        scale = (gamma * inv).reshape(1, c)
        shift = (beta - mu * gamma * inv).reshape(1, c)
        # phase B: BN-apply + ReLU + attn2, softmax over K, aggregate, linear_up, residual
        out = _build_pt_phase_b(n_pad, tm, k, c)(
            x_p, h1, val, scale, shift, w2, b2, wu, bu)
    return out[:n] if n_pad != n else out


def enc_block(p, x, pos, nbr, y, k_down):
    """Enc_block: down (Linear+BN+ReLU) -> max_pool_neighbor_x -> fps(0.5) -> KNN -> pconv."""
    xd = linear_bn_relu(x, p["down"])
    xmp = neighbor_max(xd, nbr)
    idx = fps_indices(pos, 0.5)
    x_s = jnp.take(xmp, idx, axis=0)
    pos_s = jnp.take(pos, idx, axis=0)
    y_s = jnp.take(y, idx, axis=0)
    nbr_s = knn_graph_neighbors(pos_s, k_down)
    x_out = point_trans_layer(p["pconv"], x_s, pos_s, nbr_s)
    return x_out, pos_s, nbr_s, y_s


def dec_block(p, x_coarse, pos_coarse, x_fine, pos_fine, k_up):
    """Dec_block: linear1 on coarse -> knn_interpolate(k=8) to fine pos -> KNN(k_up) -> pconv.
    NOTE: the reference also applies lin2 to the skip features, but that result is never
    consumed downstream (dead compute) -> dropped here."""
    del x_fine
    x1 = linear(x_coarse, p["lin1"]["w"], p["lin1"]["b"])
    x_int = knn_interpolate(x1, pos_coarse, pos_fine, k=8)
    nbr = knn_graph_neighbors(pos_fine, k_up)
    x_out = point_trans_layer(p["pconv"], x_int, pos_fine, nbr)
    return x_out, pos_fine, nbr


def transformer_gnn_forward(params, x, pos, y, config):
    k_down, k_up = config["k_down"], config["k_up"]
    x0 = linear(x, params["linear"]["w"], params["linear"]["b"])          # 3 -> 32 (VPU)
    nbr1 = knn_graph_neighbors(pos, k_down)
    x1 = point_trans_layer(params["pconv_in"], x0, pos, nbr1)
    x2, pos2, nbr2, y2 = enc_block(params["enc1"], x1, pos, nbr1, y, k_down)
    x3, pos3, nbr3, y3 = enc_block(params["enc2"], x2, pos2, nbr2, y2, k_down)
    x4, pos4, nbr4, y4 = enc_block(params["enc3"], x3, pos3, nbr3, y3, k_down)
    x5, pos5, nbr5, y5 = enc_block(params["enc4"], x4, pos4, nbr4, y4, k_down)
    x5m = linear(x5, params["linear_mid"]["w"], params["linear_mid"]["b"])
    x6 = point_trans_layer(params["pconv_mid"], x5m, pos5, nbr5)
    x7, pos7, _ = dec_block(params["dec1"], x6, pos5, x4, pos4, k_up)
    x8, pos8, _ = dec_block(params["dec2"], x7, pos7, x3, pos3, k_up)
    x9, pos9, _ = dec_block(params["dec3"], x8, pos8, x2, pos2, k_up)
    x10, _, _ = dec_block(params["dec4"], x9, pos9, x1, pos, k_up)
    h = linear_bn_relu(x10, params["head1"])                              # Linear(32,50)+BN+ReLU
    out = linear_bn_relu(h, params["head2"])                              # Linear(50,nc)+BN+ReLU
    return out


# ----------------------------------------------------------------------------
# Deterministic parameter init (synthetic; matches the torch module's shapes)
# ----------------------------------------------------------------------------
def init_linear(key, cin, cout, bias=True):
    kw, kb = jax.random.split(key)
    s = 1.0 / math.sqrt(cin)
    p = {"w": jax.random.uniform(kw, (cin, cout), F32, -s, s)}
    if bias:
        p["b"] = jax.random.uniform(kb, (cout,), F32, -s, s)
    return p


def init_bn(c):
    return {"gamma": jnp.ones((c,), F32), "beta": jnp.zeros((c,), F32)}


def init_linear_bn(key, cin, cout):
    p = init_linear(key, cin, cout)
    p.update(init_bn(cout))
    return p


def init_pt_layer(key, c):
    ks = jax.random.split(key, 7)
    return {
        "lin": init_linear(ks[0], c, c, bias=False),
        "lin_src": init_linear(ks[1], c, c, bias=False),
        "lin_dst": init_linear(ks[2], c, c, bias=False),
        "pos": init_linear(ks[3], 3, c),                 # pos_nn: MLP num_layers=1
        "attn1": init_linear(ks[4], c, c),               # attn_nn: MLP num_layers=2
        "attn_bn": init_bn(c),
        "attn2": init_linear(ks[5], c, c),
        "lin_up": init_linear(ks[6], c, c),
    }


def init_enc(key, cin, cout):
    k1, k2 = jax.random.split(key)
    return {"down": init_linear_bn(k1, cin, cout), "pconv": init_pt_layer(k2, cout)}


def init_dec(key, cin, cout):
    k1, k2, k3 = jax.random.split(key, 3)
    return {"lin1": init_linear(k1, cin, cout),
            "lin2": init_linear(k2, cout, cout),         # kept for shape fidelity (unused)
            "pconv": init_pt_layer(k3, cout)}


def init_model(key, num_classes):
    ks = jax.random.split(key, 14)
    return {
        "linear": init_linear(ks[0], 3, 32),
        "pconv_in": init_pt_layer(ks[1], 32),
        "enc1": init_enc(ks[2], 32, 64),
        "enc2": init_enc(ks[3], 64, 128),
        "enc3": init_enc(ks[4], 128, 256),
        "enc4": init_enc(ks[5], 256, 512),
        "linear_mid": init_linear(ks[6], 512, 512),
        "pconv_mid": init_pt_layer(ks[7], 512),
        "dec1": init_dec(ks[8], 512, 256),
        "dec2": init_dec(ks[9], 256, 128),
        "dec3": init_dec(ks[10], 128, 64),
        "dec4": init_dec(ks[11], 64, 32),
        "head1": init_linear_bn(ks[12], 32, 50),
        "head2": init_linear_bn(ks[13], 50, num_classes),
    }


# ----------------------------------------------------------------------------
if __name__ == "__main__":
    key = jax.random.PRNGKey(0)
    kparams, kx, kpos = jax.random.split(key, 3)

    config = {"k_down": 3, "k_up": 3, "num_classes": 13,
              "grid_size": [0.1, 0.2, 0.4, 0.8],
              "device": "tpu", "subsampling": "fps"}

    params = init_model(kparams, num_classes=config["num_classes"])

    N = 64  # single point cloud; 64 -> 32 -> 16 -> 8 -> 4 in the encoder
    pos = jax.random.normal(kpos, (N, 3), F32)
    x = jax.random.normal(kx, (N, 3), F32)
    y = jnp.zeros((N,), jnp.int32)   # labels carried (and subsampled) but unused by the head

    out = transformer_gnn_forward(params, x, pos, y, config)
    out = jax.block_until_ready(out)
    assert out.shape == (N, config["num_classes"]) and out.dtype == F32
    print("KERNEL_OK")
</pallas_src>

<mosaic_0001>
module attributes {stable_mosaic.version = 11 : i64} {
  func.func @_linear3_kernel(%arg0: i32, %arg1: memref<64x3xf32, #tpu.memory_space<vmem>>, %arg2: memref<3x32xf32, #tpu.memory_space<vmem>>, %arg3: memref<1x32xf32, #tpu.memory_space<vmem>>, %arg4: memref<64x32xf32, #tpu.memory_space<vmem>>) attributes {dimension_semantics = [#tpu.dimension_semantics<parallel>], iteration_bounds = array<i64: 1>, scalar_prefetch = 0 : i64, scratch_operands = 0 : i64, tpu.core_type = #tpu.core_type<tc>, window_params = [{transform_indices = @transform_0, window_bounds = array<i64: 64, 3>}, {pipeline_mode = #tpu.pipeline_mode<synchronous>, transform_indices = @transform_1, window_bounds = array<i64: 3, 32>}, {pipeline_mode = #tpu.pipeline_mode<synchronous>, transform_indices = @transform_2, window_bounds = array<i64: 1, 32>}, {transform_indices = @transform_3, window_bounds = array<i64: 64, 32>}]} {
    %c0 = arith.constant 0 : index
    %c0_0 = arith.constant 0 : index
    %0 = vector.load %arg1[%c0, %c0_0] : memref<64x3xf32, #tpu.memory_space<vmem>>, vector<64x3xf32>
    %c0_1 = arith.constant 0 : index
    %c0_2 = arith.constant 0 : index
    %1 = vector.load %arg2[%c0_1, %c0_2] : memref<3x32xf32, #tpu.memory_space<vmem>>, vector<3x32xf32>
    %2 = vector.extract_strided_slice %0 {offsets = [0, 0], sizes = [64, 1], strides = [1, 1]} : vector<64x3xf32> to vector<64x1xf32>
    %3 = vector.extract_strided_slice %1 {offsets = [0, 0], sizes = [1, 32], strides = [1, 1]} : vector<3x32xf32> to vector<1x32xf32>
    %4 = vector.broadcast %2 : vector<64x1xf32> to vector<64x32xf32>
    %5 = vector.broadcast %3 : vector<1x32xf32> to vector<64x32xf32>
    %6 = arith.mulf %4, %5 : vector<64x32xf32>
    %7 = vector.extract_strided_slice %0 {offsets = [0, 1], sizes = [64, 1], strides = [1, 1]} : vector<64x3xf32> to vector<64x1xf32>
    %8 = vector.extract_strided_slice %1 {offsets = [1, 0], sizes = [1, 32], strides = [1, 1]} : vector<3x32xf32> to vector<1x32xf32>
    %9 = vector.broadcast %7 : vector<64x1xf32> to vector<64x32xf32>
    %10 = vector.broadcast %8 : vector<1x32xf32> to vector<64x32xf32>
    %11 = arith.mulf %9, %10 : vector<64x32xf32>
    %12 = arith.addf %6, %11 : vector<64x32xf32>
    %13 = vector.extract_strided_slice %0 {offsets = [0, 2], sizes = [64, 1], strides = [1, 1]} : vector<64x3xf32> to vector<64x1xf32>
    %14 = vector.extract_strided_slice %1 {offsets = [2, 0], sizes = [1, 32], strides = [1, 1]} : vector<3x32xf32> to vector<1x32xf32>
    %15 = vector.broadcast %13 : vector<64x1xf32> to vector<64x32xf32>
    %16 = vector.broadcast %14 : vector<1x32xf32> to vector<64x32xf32>
    %17 = arith.mulf %15, %16 : vector<64x32xf32>
    %18 = arith.addf %12, %17 : vector<64x32xf32>
    %c0_3 = arith.constant 0 : index
    %c0_4 = arith.constant 0 : index
    %19 = vector.load %arg3[%c0_3, %c0_4] : memref<1x32xf32, #tpu.memory_space<vmem>>, vector<1x32xf32>
    %20 = vector.broadcast %19 : vector<1x32xf32> to vector<64x32xf32>
    %21 = arith.addf %18, %20 : vector<64x32xf32>
    %c0_5 = arith.constant 0 : index
    %c0_6 = arith.constant 0 : index
    %22 = vector.load %arg4[%c0_5, %c0_6] : memref<64x32xf32, #tpu.memory_space<vmem>>, vector<64x32xf32>
    tpu.vector_store %arg4[%c0_5, %c0_6], %21 {strides = array<i32>} : memref<64x32xf32, #tpu.memory_space<vmem>>, vector<64x32xf32>,
    return
  }
  func.func @transform_0(%arg0: i32) -> (i32, i32) {
    %c0_i32 = arith.constant 0 : i32
    %c0_i32_0 = arith.constant 0 : i32
    return %arg0, %c0_i32 : i32, i32
  }
  func.func @transform_1(%arg0: i32) -> (i32, i32) {
    %c0_i32 = arith.constant 0 : i32
    %c0_i32_0 = arith.constant 0 : i32
    %c0_i32_1 = arith.constant 0 : i32
    return %c0_i32, %c0_i32_0 : i32, i32
  }
  func.func @transform_2(%arg0: i32) -> (i32, i32) {
    %c0_i32 = arith.constant 0 : i32
    %c0_i32_0 = arith.constant 0 : i32
    %c0_i32_1 = arith.constant 0 : i32
    return %c0_i32, %c0_i32_0 : i32, i32
  }
  func.func @transform_3(%arg0: i32) -> (i32, i32) {
    %c0_i32 = arith.constant 0 : i32
    %c0_i32_0 = arith.constant 0 : i32
    return %arg0, %c0_i32 : i32, i32
  }
}

</mosaic_0001>

<llo_original>
// kernel: tpu_custom_call.1
$region0: #{tpu_custom_call.1}
  #allocation0 [shape = 'u32[]', space=smem, size = 0x4, offset = 0x4, fixed_abs, tag = 'smem constant byte address 0x4 - core index']
  #allocation1 [shape = 'u32[144,128]{1,0:T(1,128)}', space=vmem, size = 0x12000, scoped, tag = 'internal scratch']
  %s0 = inlined_call_operand.vmem [shape: f32[64,3], index: 0, kind: input, shape index: {}]
  %s1 = inlined_call_operand.vmem [shape: f32[3,32], index: 1, kind: input, shape index: {}]
  %s2 = inlined_call_operand.vmem [shape: f32[1,32], index: 2, kind: input, shape index: {}]
  %s3 = inlined_call_operand.vmem [shape: f32[64,32], index: 3, kind: output, shape index: {}]
  %s4 = sld [smem:[#allocation0]]
  $region22: #{tpu_custom_call.1} parent=0
    _
  %s6 = ssub.s32 1, %s4
  %s7 = scalar_select 0, %s6, %s4
  // Predicated region
  $region2: #{tpu_custom_call.1} parent=0 // pred_check
    _
  $region3: #{tpu_custom_call.1} parent=0 // pred_check_branch
    %9 = sbr.rel (0) target = $region5
  $region4: #{tpu_custom_call.1} parent=0 // pred_region
    _
  $region5: #{tpu_custom_call.1} parent=0 // pred_fallthru
    _
  // Predicated region
  $region6: #{tpu_custom_call.1} parent=0 // pred_check
    _
  $region7: #{tpu_custom_call.1} parent=0 // pred_check_branch
    %11 = sbr.rel (0) target = $region9
  $region8: #{tpu_custom_call.1} parent=0 // pred_region
    _
  $region9: #{tpu_custom_call.1} parent=0 // pred_fallthru
    _
  // Predicated region
  $region10: #{tpu_custom_call.1} parent=0 // pred_check
    _
  $region11: #{tpu_custom_call.1} parent=0 // pred_check_branch
    %13 = sbr.rel (0) target = $region13
  $region12: #{tpu_custom_call.1} parent=0 // pred_region
    _
  $region13: #{tpu_custom_call.1} parent=0 // pred_fallthru
    _
  %v14 = vld [vmem:[%s0] sm:$0xff]
  %v15 = vld [vmem:[%s0 + $0x8] sm:$0xff]
  %v16 = vld [vmem:[%s0 + $0x10] sm:$0xff]
  %v17 = vld [vmem:[%s0 + $0x18] sm:$0xff]
  %v18 = vld [vmem:[%s0 + $0x20] sm:$0xff]
  %v19 = vld [vmem:[%s0 + $0x28] sm:$0xff]
  %v20 = vld [vmem:[%s0 + $0x30] sm:$0xff]
  %v21 = vld [vmem:[%s0 + $0x38] sm:$0xff]
  %v22 = vld [vmem:[%s1] sm:$0x7]
  %24 = vset.pattern.permute.xlu0 0
  %25 = vperm.xlu0 %24, %v14
  %v26 = vpop.permute.xlu0 %25
  %29 = vset.pattern.permute.xlu0 0
  %30 = vperm.xlu0 %29, %v15
  %v31 = vpop.permute.xlu0 %30
  %34 = vset.pattern.permute.xlu0 0
  %35 = vperm.xlu0 %34, %v16
  %v36 = vpop.permute.xlu0 %35
  %39 = vset.pattern.permute.xlu0 0
  %40 = vperm.xlu0 %39, %v17
  %v41 = vpop.permute.xlu0 %40
  %44 = vset.pattern.permute.xlu0 0
  %45 = vperm.xlu0 %44, %v18
  %v46 = vpop.permute.xlu0 %45
  %49 = vset.pattern.permute.xlu0 0
  %50 = vperm.xlu0 %49, %v19
  %v51 = vpop.permute.xlu0 %50
  %54 = vset.pattern.permute.xlu0 0
  %55 = vperm.xlu0 %54, %v20
  %v56 = vpop.permute.xlu0 %55
  %59 = vset.pattern.permute.xlu0 0
  %60 = vperm.xlu0 %59, %v21
  %v61 = vpop.permute.xlu0 %60
  %v63 = vlaneseq
  %v64 = vshrl.u32 %v63, 7
  %v65 = vsub.s32 0, %v64
  %v66 = vrot.slane %v22, %v65
  %v67 = vmul.f32 %v26, %v66
  %v68 = vmul.f32 %v31, %v66
  %v69 = vmul.f32 %v36, %v66
  %v70 = vmul.f32 %v41, %v66
  %v71 = vmul.f32 %v46, %v66
  %v72 = vmul.f32 %v51, %v66
  %v73 = vmul.f32 %v56, %v66
  %v74 = vmul.f32 %v61, %v66
  %75 = vset.pattern.permute.xlu0 1
  %76 = vperm.xlu0 %75, %v14
  %v77 = vpop.permute.xlu0 %76
  %79 = vset.pattern.permute.xlu0 1
  %80 = vperm.xlu0 %79, %v15
  %v81 = vpop.permute.xlu0 %80
  %83 = vset.pattern.permute.xlu0 1
  %84 = vperm.xlu0 %83, %v16
  %v85 = vpop.permute.xlu0 %84
  %87 = vset.pattern.permute.xlu0 1
  %88 = vperm.xlu0 %87, %v17
  %v89 = vpop.permute.xlu0 %88
  %91 = vset.pattern.permute.xlu0 1
  %92 = vperm.xlu0 %91, %v18
  %v93 = vpop.permute.xlu0 %92
  %95 = vset.pattern.permute.xlu0 1
  %96 = vperm.xlu0 %95, %v19
  %v97 = vpop.permute.xlu0 %96
  %99 = vset.pattern.permute.xlu0 1
  %100 = vperm.xlu0 %99, %v20
  %v101 = vpop.permute.xlu0 %100
  %103 = vset.pattern.permute.xlu0 1
  %104 = vperm.xlu0 %103, %v21
  %v105 = vpop.permute.xlu0 %104
  %v107 = vlaneseq
  %v108 = vshrl.u32 %v107, 7
  %v109 = vsub.s32 1, %v108
  %v110 = vrot.slane %v22, %v109
  %v111 = vmul.f32 %v77, %v110
  %v112 = vmul.f32 %v81, %v110
  %v113 = vmul.f32 %v85, %v110
  %v114 = vmul.f32 %v89, %v110
  %v115 = vmul.f32 %v93, %v110
  %v116 = vmul.f32 %v97, %v110
  %v117 = vmul.f32 %v101, %v110
  %v118 = vmul.f32 %v105, %v110
  %v119 = vadd.f32 %v67, %v111
  %v120 = vadd.f32 %v68, %v112
  %v121 = vadd.f32 %v69, %v113
  %v122 = vadd.f32 %v70, %v114
  %v123 = vadd.f32 %v71, %v115
  %v124 = vadd.f32 %v72, %v116
  %v125 = vadd.f32 %v73, %v117
  %v126 = vadd.f32 %v74, %v118
  %127 = vset.pattern.permute.xlu0 2
  %128 = vperm.xlu0 %127, %v14
  %v129 = vpop.permute.xlu0 %128
  %131 = vset.pattern.permute.xlu0 2
  %132 = vperm.xlu0 %131, %v15
  %v133 = vpop.permute.xlu0 %132
  %135 = vset.pattern.permute.xlu0 2
  %136 = vperm.xlu0 %135, %v16
  %v137 = vpop.permute.xlu0 %136
  %139 = vset.pattern.permute.xlu0 2
  %140 = vperm.xlu0 %139, %v17
  %v141 = vpop.permute.xlu0 %140
  %143 = vset.pattern.permute.xlu0 2
  %144 = vperm.xlu0 %143, %v18
  %v145 = vpop.permute.xlu0 %144
  %147 = vset.pattern.permute.xlu0 2
  %148 = vperm.xlu0 %147, %v19
  %v149 = vpop.permute.xlu0 %148
  %151 = vset.pattern.permute.xlu0 2
  %152 = vperm.xlu0 %151, %v20
  %v153 = vpop.permute.xlu0 %152
  %155 = vset.pattern.permute.xlu0 2
  %156 = vperm.xlu0 %155, %v21
  %v157 = vpop.permute.xlu0 %156
  %v159 = vlaneseq
  %v160 = vshrl.u32 %v159, 7
  %v161 = vsub.s32 2, %v160
  %v162 = vrot.slane %v22, %v161
  %v163 = vmul.f32 %v129, %v162
  %v164 = vmul.f32 %v133, %v162
  %v165 = vmul.f32 %v137, %v162
  %v166 = vmul.f32 %v141, %v162
  %v167 = vmul.f32 %v145, %v162
  %v168 = vmul.f32 %v149, %v162
  %v169 = vmul.f32 %v153, %v162
  %v170 = vmul.f32 %v157, %v162
  %v171 = vadd.f32 %v119, %v163
  %v172 = vadd.f32 %v120, %v164
  %v173 = vadd.f32 %v121, %v165
  %v174 = vadd.f32 %v122, %v166
  %v175 = vadd.f32 %v123, %v167
  %v176 = vadd.f32 %v124, %v168
  %v177 = vadd.f32 %v125, %v169
  %v178 = vadd.f32 %v126, %v170
  %v179 = vld [vmem:[%s2] sm:$0x1]
  %v181 = vlaneseq
  %v182 = vshrl.u32 %v181, 7
  %v183 = vsub.s32 0, %v182
  %v184 = vrot.slane %v179, %v183
  %v186 = vadd.f32 %v171, %v184
  %v187 = vadd.f32 %v172, %v184
  %v188 = vadd.f32 %v173, %v184
  %v189 = vadd.f32 %v174, %v184
  %v190 = vadd.f32 %v175, %v184
  %v191 = vadd.f32 %v176, %v184
  %v192 = vadd.f32 %v177, %v184
  %v193 = vadd.f32 %v178, %v184
  %vm194 = vcmask 261120
  %195 = vst.msk [vmem:[%s3] sm:$0xff] %vm194, %v186
  %196 = vst.msk [vmem:[%s3 + $0x8] sm:$0xff] %vm194, %v187
  %197 = vst.msk [vmem:[%s3 + $0x10] sm:$0xff] %vm194, %v188
  %198 = vst.msk [vmem:[%s3 + $0x18] sm:$0xff] %vm194, %v189
  %199 = vst.msk [vmem:[%s3 + $0x20] sm:$0xff] %vm194, %v190
  %200 = vst.msk [vmem:[%s3 + $0x28] sm:$0xff] %vm194, %v191
  %201 = vst.msk [vmem:[%s3 + $0x30] sm:$0xff] %vm194, %v192
  %202 = vst.msk [vmem:[%s3 + $0x38] sm:$0xff] %vm194, %v193
  // Predicated region
  $region14: #{tpu_custom_call.1} parent=0 // pred_check
    _
  $region15: #{tpu_custom_call.1} parent=0 // pred_check_branch
    %204 = sbr.rel (0) target = $region17
  $region16: #{tpu_custom_call.1} parent=0 // pred_region
    _
  $region17: #{tpu_custom_call.1} parent=0 // pred_fallthru
    _
  // Predicated region
  $region18: #{tpu_custom_call.1} parent=0 // pred_check
    _
  $region19: #{tpu_custom_call.1} parent=0 // pred_check_branch
    %206 = sbr.rel (0) target = $region21
  $region20: #{tpu_custom_call.1} parent=0 // pred_region
    _
  $region21: #{tpu_custom_call.1} parent=0 // pred_fallthru
    _

</llo_original>
